<compile_context>
chip_gen: v5e
topology: v5e:2x2
jax: 0.10.0
libtpu: 0.0.40
codegen_flags: <defaults>
</compile_context>

<pallas_src>
import functools

import jax
import jax.numpy as jnp
from jax.experimental import pallas as pl
from jax.experimental.pallas import tpu as pltpu


def _apply_activation(name, y):
    """Static (trace-time) activation selection."""
    if name is None:
        return y
    if name == "relu":
        return jnp.maximum(y, 0.0)
    if name == "tanh":
        return jnp.tanh(y)
    if name == "sigmoid":
        return jax.nn.sigmoid(y)
    if name == "gelu":
        return jax.nn.gelu(y)
    raise ValueError(f"unsupported activation: {name}")


def _layer_kernel(x_ref, w_ref, b_ref, o_ref, *, activation):
    # x_ref: (tile_rows, inp)  w_ref: (inp, outp)  b_ref: (1, outp)
    # o_ref: (tile_rows, outp)
    y = (
        jnp.dot(x_ref[...], w_ref[...], preferred_element_type=jnp.float32)
        + b_ref[...]
    )
    o_ref[...] = _apply_activation(activation, y).astype(o_ref.dtype)


def layer_forward(x, weight_t, bias, *, activation="relu", tile_rows=512):
    """Pallas forward for Layer.

    x:        (N, inp)  float32
    weight_t: (inp, outp) float32  (PyTorch weight transposed)
    bias:     (outp,)   float32
    activation: None (output=True) or one of "relu"/"tanh"/"sigmoid"/"gelu".
    """
    n, inp = x.shape
    outp = weight_t.shape[1]
    bias2d = bias.reshape(1, outp)

    # Row tile: biggest tile <= tile_rows that keeps blocks legal
    # (sublane dim divisible by 8, or equal to the full array dim).
    tm = min(n, tile_rows)
    if n % tm != 0 or tm % 8 != 0:
        tm = n  # small / ragged batch -> single whole-array block
    grid = (pl.cdiv(n, tm),)

    kernel = functools.partial(_layer_kernel, activation=activation)

    return pl.pallas_call(
        kernel,
        out_shape=jax.ShapeDtypeStruct((n, outp), jnp.float32),
        grid=grid,
        in_specs=[
            pl.BlockSpec((tm, inp), lambda i: (i, 0)),      # x row tile
            pl.BlockSpec((inp, outp), lambda i: (0, 0)),    # weight (resident)
            pl.BlockSpec((1, outp), lambda i: (0, 0)),      # bias   (resident)
        ],
        out_specs=pl.BlockSpec((tm, outp), lambda i: (i, 0)),
        compiler_params=pltpu.CompilerParams(
            dimension_semantics=("parallel",),  # shard rows across TCs on v7x
        ),
    )(x, weight_t, bias2d)


def init_params(key, inp, outp):
    """Deterministic init mirroring PyTorch nn.Linear defaults."""
    k_w, k_b = jax.random.split(key)
    bound = 1.0 / jnp.sqrt(jnp.float32(inp))
    # PyTorch weight is (outp, inp); store transposed (inp, outp) for the kernel.
    w = jax.random.uniform(
        k_w, (outp, inp), dtype=jnp.float32, minval=-bound, maxval=bound
    )
    b = jax.random.uniform(
        k_b, (outp,), dtype=jnp.float32, minval=-bound, maxval=bound
    )
    return w.T, b


if __name__ == "__main__":
    key = jax.random.PRNGKey(0)
    k_p, k_x = jax.random.split(key)

    batch, inp, outp = 16, 32, 32
    weight_t, bias = init_params(k_p, inp, outp)
    x = jax.random.normal(k_x, (batch, inp), dtype=jnp.float32)

    # Hidden layer: Linear + ReLU (output=False, func=nn.ReLU)
    out_hidden = layer_forward(x, weight_t, bias, activation="relu")
    # Output layer: Linear only (output=True)
    out_final = layer_forward(x, weight_t, bias, activation=None)
    jax.block_until_ready((out_hidden, out_final))

    # Pure-JAX reference check.
    ref_lin = x @ weight_t + bias[None, :]
    ref_hidden = jnp.maximum(ref_lin, 0.0)

    assert out_hidden.shape == (batch, outp)
    assert out_final.shape == (batch, outp)
    assert jnp.allclose(out_hidden, ref_hidden, atol=1e-5, rtol=1e-5), "relu mismatch"
    assert jnp.allclose(out_final, ref_lin, atol=1e-5, rtol=1e-5), "linear mismatch"

    print("KERNEL_OK")
</pallas_src>

<mosaic_0001>
module attributes {stable_mosaic.version = 11 : i64} {
  func.func @_layer_kernel(%arg0: i32, %arg1: memref<16x32xf32, #tpu.memory_space<vmem>>, %arg2: memref<32x32xf32, #tpu.memory_space<vmem>>, %arg3: memref<1x32xf32, #tpu.memory_space<vmem>>, %arg4: memref<16x32xf32, #tpu.memory_space<vmem>>) attributes {dimension_semantics = [#tpu.dimension_semantics<parallel>], iteration_bounds = array<i64: 1>, scalar_prefetch = 0 : i64, scratch_operands = 0 : i64, tpu.core_type = #tpu.core_type<tc>, window_params = [{transform_indices = @transform_0, window_bounds = array<i64: 16, 32>}, {pipeline_mode = #tpu.pipeline_mode<synchronous>, transform_indices = @transform_1, window_bounds = array<i64: 32, 32>}, {pipeline_mode = #tpu.pipeline_mode<synchronous>, transform_indices = @transform_2, window_bounds = array<i64: 1, 32>}, {transform_indices = @transform_3, window_bounds = array<i64: 16, 32>}]} {
    %c0 = arith.constant 0 : index
    %c0_0 = arith.constant 0 : index
    %0 = vector.load %arg1[%c0, %c0_0] : memref<16x32xf32, #tpu.memory_space<vmem>>, vector<16x32xf32>
    %c0_1 = arith.constant 0 : index
    %c0_2 = arith.constant 0 : index
    %1 = vector.load %arg2[%c0_1, %c0_2] : memref<32x32xf32, #tpu.memory_space<vmem>>, vector<32x32xf32>
    %cst = arith.constant dense<0.000000e+00> : vector<16x32xf32>
    %2 = tpu.matmul %0, %1, %cst {dimension_numbers = #tpu.dot_dimension_numbers<[1], [0], [0], [1], [0, 0, 1, 1], [], []>} : vector<16x32xf32>, vector<32x32xf32>, vector<16x32xf32> -> vector<16x32xf32>
    %c0_3 = arith.constant 0 : index
    %c0_4 = arith.constant 0 : index
    %3 = vector.load %arg3[%c0_3, %c0_4] : memref<1x32xf32, #tpu.memory_space<vmem>>, vector<1x32xf32>
    %4 = vector.broadcast %3 : vector<1x32xf32> to vector<16x32xf32>
    %5 = arith.addf %2, %4 : vector<16x32xf32>
    %cst_5 = arith.constant 0.000000e+00 : f32
    %6 = vector.broadcast %cst_5 : f32 to vector<16x32xf32>
    %7 = arith.maximumf %5, %6 : vector<16x32xf32>
    %c0_6 = arith.constant 0 : index
    %c0_7 = arith.constant 0 : index
    %8 = vector.load %arg4[%c0_6, %c0_7] : memref<16x32xf32, #tpu.memory_space<vmem>>, vector<16x32xf32>
    tpu.vector_store %arg4[%c0_6, %c0_7], %7 {strides = array<i32>} : memref<16x32xf32, #tpu.memory_space<vmem>>, vector<16x32xf32>,
    return
  }
  func.func @transform_0(%arg0: i32) -> (i32, i32) {
    %c0_i32 = arith.constant 0 : i32
    %c0_i32_0 = arith.constant 0 : i32
    return %arg0, %c0_i32 : i32, i32
  }
  func.func @transform_1(%arg0: i32) -> (i32, i32) {
    %c0_i32 = arith.constant 0 : i32
    %c0_i32_0 = arith.constant 0 : i32
    %c0_i32_1 = arith.constant 0 : i32
    return %c0_i32, %c0_i32_0 : i32, i32
  }
  func.func @transform_2(%arg0: i32) -> (i32, i32) {
    %c0_i32 = arith.constant 0 : i32
    %c0_i32_0 = arith.constant 0 : i32
    %c0_i32_1 = arith.constant 0 : i32
    return %c0_i32, %c0_i32_0 : i32, i32
  }
  func.func @transform_3(%arg0: i32) -> (i32, i32) {
    %c0_i32 = arith.constant 0 : i32
    %c0_i32_0 = arith.constant 0 : i32
    return %arg0, %c0_i32 : i32, i32
  }
}

</mosaic_0001>

<llo_original>
// kernel: tpu_custom_call.1
$region0: #{tpu_custom_call.1}
  #allocation0 [shape = 'u32[]', space=smem, size = 0x4, offset = 0x4, fixed_abs, tag = 'smem constant byte address 0x4 - core index']
  #allocation1 [shape = 'u32[72,128]{1,0:T(1,128)}', space=vmem, size = 0x9000, scoped, tag = 'internal scratch']
  %s0 = inlined_call_operand.hbm [shape: f32[16,32], index: 0, kind: input, shape index: {}]
  %s1 = inlined_call_operand.hbm [shape: f32[32,32], index: 1, kind: input, shape index: {}]
  %s2 = inlined_call_operand.vmem [shape: f32[1,32], index: 2, kind: input, shape index: {}]
  %s3 = inlined_call_operand.hbm [shape: f32[16,32], index: 3, kind: output, shape index: {}]
  %s4 = sld [smem:[#allocation0]]
  $region30: #{tpu_custom_call.1} parent=0
    _
  %s6 = ssub.s32 1, %s4
  %s7 = scalar_select 0, %s6, %s4
  $region1: #{tpu_custom_call.1} parent=0
    #allocation2 [shape = 'u8[8192]{0}', space=vmem, size = 0x2000, scoped, tag = 'input window, operand 0, single buffered']
    #allocation3 [shape = 's32[1]{0}', space=sflag, size = 0x4, scoped, tag = 'scoped memory for tpu_custom_call.1']
    #allocation4 [shape = 's32[1]{0}', space=sflag, size = 0x4, scoped, tag = 'scoped memory for tpu_custom_call.1']
    #allocation5 [shape = 'u8[16384]{0}', space=vmem, size = 0x4000, scoped, tag = 'input window, operand 1, single buffered']
    #allocation6 [shape = 's32[1]{0}', space=sflag, size = 0x4, scoped, tag = 'scoped memory for tpu_custom_call.1']
    #allocation7 [shape = 'u8[8192]{0}', space=vmem, size = 0x2000, scoped, tag = 'output window, operand 0, single buffered']
    %8 = vsyncpa [#allocation3], 0
    %9 = vsyncpa [#allocation6], 0
    %10 = vsyncpa [#allocation4], 0
    // Predicated region
    $region2: #{tpu_custom_call.1} parent=1 // pred_check
      _
    $region3: #{tpu_custom_call.1} parent=1 // pred_check_branch
      %12 = sbr.rel (0) target = $region5
    $region4: #{tpu_custom_call.1} parent=1 // pred_region
      %14 = vsyncadd [#allocation3], 0
      %s15 = sshll.u32 %s0, 4
      %s16 = int_to_ptr.hbm [resolvable:$true] %s15
      %s17 = sshll.u32 [#allocation2], 4
      %s18 = int_to_ptr.vmem [resolvable:$true] %s17
      %23 = dma.hbm_to_vmem [thread:$0]  %s16, 256, %s18, [#allocation3], 128, 128, 8
    $region5: #{tpu_custom_call.1} parent=1 // pred_fallthru
      _
    // Predicated region
    $region6: #{tpu_custom_call.1} parent=1 // pred_check
      _
    $region7: #{tpu_custom_call.1} parent=1 // pred_check_branch
      %25 = sbr.rel (0) target = $region9
    $region8: #{tpu_custom_call.1} parent=1 // pred_region
      %27 = vsyncadd [#allocation6], 0
      %s28 = sshll.u32 %s1, 4
      %s29 = int_to_ptr.hbm [resolvable:$true] %s28
      %s30 = sshll.u32 [#allocation5], 4
      %s31 = int_to_ptr.vmem [resolvable:$true] %s30
      %36 = dma.hbm_to_vmem [thread:$0]  %s29, 512, %s31, [#allocation6], 128, 128, 8
    $region9: #{tpu_custom_call.1} parent=1 // pred_fallthru
      _
    // Predicated region
    $region10: #{tpu_custom_call.1} parent=1 // pred_check
      _
    $region11: #{tpu_custom_call.1} parent=1 // pred_check_branch
      %38 = sbr.rel (0) target = $region13
    $region12: #{tpu_custom_call.1} parent=1 // pred_region
      _
    $region13: #{tpu_custom_call.1} parent=1 // pred_fallthru
      _
    // Predicated region
    $region14: #{tpu_custom_call.1} parent=1 // pred_check
      _
    $region15: #{tpu_custom_call.1} parent=1 // pred_check_branch
      %40 = sbr.rel (0) target = $region17
    $region16: #{tpu_custom_call.1} parent=1 // pred_region
      %42 = dma.done [#allocation3], 256
    $region17: #{tpu_custom_call.1} parent=1 // pred_fallthru
      _
    // Predicated region
    $region18: #{tpu_custom_call.1} parent=1 // pred_check
      _
    $region19: #{tpu_custom_call.1} parent=1 // pred_check_branch
      %44 = sbr.rel (0) target = $region21
    $region20: #{tpu_custom_call.1} parent=1 // pred_region
      %46 = dma.done [#allocation6], 512
    $region21: #{tpu_custom_call.1} parent=1 // pred_fallthru
      _
    %v47 = vld [vmem:[#allocation2] sm:$0xff]
    %v48 = vld [vmem:[#allocation2 + $0x8] sm:$0xff]
    %v49 = vld [vmem:[#allocation5] sm:$0xff]
    %v50 = vld [vmem:[#allocation5 + $0x8] sm:$0xff]
    %v51 = vld [vmem:[#allocation5 + $0x10] sm:$0xff]
    %v52 = vld [vmem:[#allocation5 + $0x18] sm:$0xff]
    %v53 = vld [vmem:[%s2] sm:$0x1]
    %v55 = vperm.slane %v53, 0
    %vm57 = vcmask 261120
    %v59 = vsel %vm57, %v47, 0
    %v62 = vsel %vm57, %v48, 0
    %64 = vmatpush.msra.mxu0 0.0
    %65 = vmatpush.msra.mxu0 0.0
    %66 = vmatpush.msra.mxu0 0.0
    %67 = vmatpush.msra.mxu0 0.0
    %68 = vmatpush.msra.mxu0 0.0
    %69 = vmatpush.msra.mxu0 0.0
    %70 = vmatpush.msra.mxu0 0.0
    %71 = vmatpush.msra.mxu0 0.0
    %72 = vmatpush.msra.mxu0 0.0
    %73 = vmatpush.msra.mxu0 0.0
    %74 = vmatpush.msra.mxu0 0.0
    %75 = vmatpush.msra.mxu0 0.0
    %76 = vmatpush.msra.mxu0 %v52
    %77 = vmatpush.msra.mxu0 %v51
    %78 = vmatpush.msra.mxu0 %v50
    %79 = vmatpush.msra.mxu0 %v49
    %80 = vmatmul.f32.gmra.mxu0 %v59
    %v81 = vpop.f32.mrf.mxu0
    %v82 = vadd.f32 %v55, %v81
    %83 = vmatmul.f32.gmra.mxu0 %v62
    %v84 = vpop.f32.mrf.mxu0
    %v85 = vadd.f32 %v55, %v84
    %86 = vdwg.mxu0
    %v87 = vmax.f32 %v82, 0.0
    %v88 = vmax.f32 %v85, 0.0
    %89 = vst.msk [vmem:[#allocation7] sm:$0xff] %vm57, %v87
    %90 = vst.msk [vmem:[#allocation7 + $0x8] sm:$0xff] %vm57, %v88
    // Predicated region
    $region22: #{tpu_custom_call.1} parent=1 // pred_check
      _
    $region23: #{tpu_custom_call.1} parent=1 // pred_check_branch
      %92 = sbr.rel (0) target = $region25
    $region24: #{tpu_custom_call.1} parent=1 // pred_region
      %94 = vsyncadd [#allocation4], 0
      %s95 = sshll.u32 [#allocation7], 4
      %s96 = int_to_ptr.vmem [resolvable:$true] %s95
      %s97 = sshll.u32 %s3, 4
      %s98 = int_to_ptr.hbm [resolvable:$true] %s97
      %103 = dma.vmem_to_hbm [thread:$0]  %s96, 256, %s98, [#allocation4], 128, 128, 8
    $region25: #{tpu_custom_call.1} parent=1 // pred_fallthru
      _
    // Predicated region
    $region26: #{tpu_custom_call.1} parent=1 // pred_check
      _
    $region27: #{tpu_custom_call.1} parent=1 // pred_check_branch
      %105 = sbr.rel (0) target = $region29
    $region28: #{tpu_custom_call.1} parent=1 // pred_region
      %107 = dma.done [#allocation4], 256
    $region29: #{tpu_custom_call.1} parent=1 // pred_fallthru
      _
    %108 = vsyncpa [#allocation3], 1
    %109 = vsyncpa [#allocation6], 1
    %110 = vsyncpa [#allocation4], 1

</llo_original>
